<compile_context>
chip_gen: v5e
topology: v5e:2x2
jax: 0.10.0
libtpu: 0.0.40
codegen_flags: <defaults>
</compile_context>

<pallas_src>
import jax
import jax.numpy as jnp
from jax.experimental import pallas as pl
from jax.experimental.pallas import tpu as pltpu


def _round_up(n, m):
    return ((n + m - 1) // m) * m


def ae_kernel(x_ref,
              w1_ref, b1_ref,
              w2_ref, b2_ref,
              w3_ref, b3_ref,
              w4_ref, b4_ref,
              out_ref):
    wdt = w1_ref.dtype          # matmul input dtype (f32 or bf16); accumulation is f32

    x = x_ref[...]

    # encoder: Linear(input_dim, 128) -> ReLU
    h = jnp.dot(x.astype(wdt), w1_ref[...],
                preferred_element_type=jnp.float32) + b1_ref[...]
    h = jnp.maximum(h, 0.0)
    # encoder: Linear(128, output_dim) -> ReLU
    h = jnp.dot(h.astype(wdt), w2_ref[...],
                preferred_element_type=jnp.float32) + b2_ref[...]
    h = jnp.maximum(h, 0.0)
    # decoder: Linear(output_dim, 128) -> ReLU
    h = jnp.dot(h.astype(wdt), w3_ref[...],
                preferred_element_type=jnp.float32) + b3_ref[...]
    h = jnp.maximum(h, 0.0)
    # decoder: Linear(128, input_dim)  (no activation)
    h = jnp.dot(h.astype(wdt), w4_ref[...],
                preferred_element_type=jnp.float32) + b4_ref[...]

    out_ref[...] = h.astype(out_ref.dtype)


def ae_nonlinear_forward(x, params, *, batch_tile=512, stream_dtype=None):
    """Fused AE_nonlinear forward.

    batch_tile:   rows per grid step (default 512; multiple of 256 preferred on
                  v6e/v7x, 128 sufficient on v5e).  Small batches shrink the tile.
    stream_dtype: e.g. jnp.bfloat16 to stream x / weights / output at half the HBM
                  bytes (f32 accumulation is kept).  None => pure f32 (bit-exact
                  vs the f32 reference).
    """
    w1, b1, w2, b2, w3, b3, w4, b4 = params
    B, input_dim = x.shape
    hidden = w1.shape[1]            # 128
    output_dim = w2.shape[1]

    # ---- lane padding: make feature dims multiples of 128 (lane-dense) ----
    D = _round_up(input_dim, 128)
    P = _round_up(output_dim, 128)
    if D != input_dim:
        x = jnp.pad(x, ((0, 0), (0, D - input_dim)))
        w1 = jnp.pad(w1, ((0, D - input_dim), (0, 0)))
        w4 = jnp.pad(w4, ((0, 0), (0, D - input_dim)))
        b4 = jnp.pad(b4, ((0, 0), (0, D - input_dim)))
    if P != output_dim:
        w2 = jnp.pad(w2, ((0, 0), (0, P - output_dim)))
        b2 = jnp.pad(b2, ((0, 0), (0, P - output_dim)))
        w3 = jnp.pad(w3, ((0, P - output_dim), (0, 0)))

    # ---- batch tiling (pad ragged / small batches instead of asserting) ----
    tile = int(batch_tile)
    if B < tile:
        tile = max(8, _round_up(B, 8))
    B_pad = _round_up(B, tile)
    if B_pad != B:
        x = jnp.pad(x, ((0, B_pad - B), (0, 0)))
    grid = (B_pad // tile,)

    # ---- dtype handling: optionally stream x / weights / out in bf16 ----
    out_dtype = x.dtype
    if stream_dtype is not None:
        x = x.astype(stream_dtype)
        w1, w2, w3, w4 = (w.astype(stream_dtype) for w in (w1, w2, w3, w4))
        out_dtype = jnp.dtype(stream_dtype)
    # biases stay f32: they are added to the f32 MXU accumulator.
    b1, b2, b3, b4 = (b.astype(jnp.float32) for b in (b1, b2, b3, b4))

    # Weights / biases are tiny and their index_map is constant -> resident every step.
    def full_spec(shape):
        return pl.BlockSpec(shape, lambda i: tuple(0 for _ in shape))

    flops = 2 * B_pad * (D * hidden + hidden * P + P * hidden + hidden * D)
    bytes_accessed = (
        x.size * x.dtype.itemsize
        + B_pad * D * jnp.dtype(out_dtype).itemsize
        + sum(a.size * a.dtype.itemsize for a in (w1, b1, w2, b2, w3, b3, w4, b4)))
    cost = pl.CostEstimate(flops=flops, transcendentals=0,
                           bytes_accessed=bytes_accessed)

    out = pl.pallas_call(
        ae_kernel,
        out_shape=jax.ShapeDtypeStruct((B_pad, D), out_dtype),
        grid_spec=pltpu.PrefetchScalarGridSpec(
            num_scalar_prefetch=0,
            grid=grid,
            in_specs=[
                pl.BlockSpec((tile, D), lambda i: (i, 0)),   # streamed x tile
                full_spec(w1.shape), full_spec(b1.shape),
                full_spec(w2.shape), full_spec(b2.shape),
                full_spec(w3.shape), full_spec(b3.shape),
                full_spec(w4.shape), full_spec(b4.shape),
            ],
            out_specs=pl.BlockSpec((tile, D), lambda i: (i, 0)),
        ),
        compiler_params=pltpu.CompilerParams(
            dimension_semantics=("parallel",)),   # batch axis sharded across TCs (v7x)
        cost_estimate=cost,
    )(x, w1, b1, w2, b2, w3, b3, w4, b4)

    if B_pad != B or D != input_dim:
        out = out[:B, :input_dim]
    return out


def init_params(key, input_dim, output_dim, hidden=128, dtype=jnp.float32):
    """Deterministic init mirroring torch.nn.Linear's default (uniform +/- 1/sqrt(fan_in)).
    Weights stored as (in_features, out_features); biases as (1, out_features)."""
    def linear(key, fan_in, fan_out):
        kw, kb = jax.random.split(key)
        bound = 1.0 / jnp.sqrt(fan_in)
        w = jax.random.uniform(kw, (fan_in, fan_out), dtype, -bound, bound)
        b = jax.random.uniform(kb, (1, fan_out), dtype, -bound, bound)
        return w, b

    k1, k2, k3, k4 = jax.random.split(key, 4)
    w1, b1 = linear(k1, input_dim, hidden)      # encoder[0]
    w2, b2 = linear(k2, hidden, output_dim)     # encoder[2]
    w3, b3 = linear(k3, output_dim, hidden)     # decoder[0]
    w4, b4 = linear(k4, hidden, input_dim)      # decoder[2]
    return (w1, b1, w2, b2, w3, b3, w4, b4)


def reference_forward(x, params):
    w1, b1, w2, b2, w3, b3, w4, b4 = params
    h1 = jnp.maximum(x @ w1 + b1, 0.0)
    enc = jnp.maximum(h1 @ w2 + b2, 0.0)
    h2 = jnp.maximum(enc @ w3 + b3, 0.0)
    return h2 @ w4 + b4


if __name__ == "__main__":
    key = jax.random.PRNGKey(0)
    k_param, k_x = jax.random.split(key)

    batch, input_dim, output_dim = 8, 64, 16
    params = init_params(k_param, input_dim, output_dim)
    x = jax.random.normal(k_x, (batch, input_dim), jnp.float32)

    # 1) f32 path at small shapes: must match the reference tightly.
    out = ae_nonlinear_forward(x, params)
    out = jax.block_until_ready(out)
    ref = reference_forward(x, params)
    assert out.shape == (batch, input_dim)
    assert jnp.allclose(out, ref, atol=1e-4, rtol=1e-4), "f32 mismatch vs reference"

    # 2) bf16-streamed large-batch path (the performance configuration):
    #    batch 1024 / tile 512 -> 2 parallel grid steps (both TCs on v7x).
    xb = jax.random.normal(k_x, (1024, input_dim), jnp.float32)
    out_bf = ae_nonlinear_forward(xb, params, batch_tile=512,
                                  stream_dtype=jnp.bfloat16)
    out_bf = jax.block_until_ready(out_bf)
    ref_b = reference_forward(xb, params)
    max_err = jnp.max(jnp.abs(out_bf.astype(jnp.float32) - ref_b))
    assert out_bf.shape == (1024, input_dim)
    assert max_err < 1e-1, f"bf16-streamed path mismatch: {max_err}"

    print("KERNEL_OK")
</pallas_src>

<mosaic_0001>
module attributes {stable_mosaic.version = 11 : i64} {
  func.func @ae_kernel(%arg0: i32, %arg1: memref<8x128xf32, #tpu.memory_space<vmem>>, %arg2: memref<128x128xf32, #tpu.memory_space<vmem>>, %arg3: memref<1x128xf32, #tpu.memory_space<vmem>>, %arg4: memref<128x128xf32, #tpu.memory_space<vmem>>, %arg5: memref<1x128xf32, #tpu.memory_space<vmem>>, %arg6: memref<128x128xf32, #tpu.memory_space<vmem>>, %arg7: memref<1x128xf32, #tpu.memory_space<vmem>>, %arg8: memref<128x128xf32, #tpu.memory_space<vmem>>, %arg9: memref<1x128xf32, #tpu.memory_space<vmem>>, %arg10: memref<8x128xf32, #tpu.memory_space<vmem>>) attributes {dimension_semantics = [#tpu.dimension_semantics<parallel>], iteration_bounds = array<i64: 1>, scalar_prefetch = 0 : i64, scratch_operands = 0 : i64, tpu.core_type = #tpu.core_type<tc>, window_params = [{transform_indices = @transform_0, window_bounds = array<i64: 8, 128>}, {pipeline_mode = #tpu.pipeline_mode<synchronous>, transform_indices = @transform_1, window_bounds = array<i64: 128, 128>}, {pipeline_mode = #tpu.pipeline_mode<synchronous>, transform_indices = @transform_2, window_bounds = array<i64: 1, 128>}, {pipeline_mode = #tpu.pipeline_mode<synchronous>, transform_indices = @transform_3, window_bounds = array<i64: 128, 128>}, {pipeline_mode = #tpu.pipeline_mode<synchronous>, transform_indices = @transform_4, window_bounds = array<i64: 1, 128>}, {pipeline_mode = #tpu.pipeline_mode<synchronous>, transform_indices = @transform_5, window_bounds = array<i64: 128, 128>}, {pipeline_mode = #tpu.pipeline_mode<synchronous>, transform_indices = @transform_6, window_bounds = array<i64: 1, 128>}, {pipeline_mode = #tpu.pipeline_mode<synchronous>, transform_indices = @transform_7, window_bounds = array<i64: 128, 128>}, {pipeline_mode = #tpu.pipeline_mode<synchronous>, transform_indices = @transform_8, window_bounds = array<i64: 1, 128>}, {transform_indices = @transform_9, window_bounds = array<i64: 8, 128>}]} {
    %c0 = arith.constant 0 : index
    %c0_0 = arith.constant 0 : index
    %0 = vector.load %arg1[%c0, %c0_0] : memref<8x128xf32, #tpu.memory_space<vmem>>, vector<8x128xf32>
    %c0_1 = arith.constant 0 : index
    %c0_2 = arith.constant 0 : index
    %1 = vector.load %arg2[%c0_1, %c0_2] : memref<128x128xf32, #tpu.memory_space<vmem>>, vector<128x128xf32>
    %cst = arith.constant dense<0.000000e+00> : vector<8x128xf32>
    %2 = tpu.matmul %0, %1, %cst {dimension_numbers = #tpu.dot_dimension_numbers<[1], [0], [0], [1], [0, 0, 1, 1], [], []>} : vector<8x128xf32>, vector<128x128xf32>, vector<8x128xf32> -> vector<8x128xf32>
    %c0_3 = arith.constant 0 : index
    %c0_4 = arith.constant 0 : index
    %3 = vector.load %arg3[%c0_3, %c0_4] : memref<1x128xf32, #tpu.memory_space<vmem>>, vector<1x128xf32>
    %4 = vector.broadcast %3 : vector<1x128xf32> to vector<8x128xf32>
    %5 = arith.addf %2, %4 : vector<8x128xf32>
    %cst_5 = arith.constant 0.000000e+00 : f32
    %6 = vector.broadcast %cst_5 : f32 to vector<8x128xf32>
    %7 = arith.maximumf %5, %6 : vector<8x128xf32>
    %c0_6 = arith.constant 0 : index
    %c0_7 = arith.constant 0 : index
    %8 = vector.load %arg4[%c0_6, %c0_7] : memref<128x128xf32, #tpu.memory_space<vmem>>, vector<128x128xf32>
    %cst_8 = arith.constant dense<0.000000e+00> : vector<8x128xf32>
    %9 = tpu.matmul %7, %8, %cst_8 {dimension_numbers = #tpu.dot_dimension_numbers<[1], [0], [0], [1], [0, 0, 1, 1], [], []>} : vector<8x128xf32>, vector<128x128xf32>, vector<8x128xf32> -> vector<8x128xf32>
    %c0_9 = arith.constant 0 : index
    %c0_10 = arith.constant 0 : index
    %10 = vector.load %arg5[%c0_9, %c0_10] : memref<1x128xf32, #tpu.memory_space<vmem>>, vector<1x128xf32>
    %11 = vector.broadcast %10 : vector<1x128xf32> to vector<8x128xf32>
    %12 = arith.addf %9, %11 : vector<8x128xf32>
    %cst_11 = arith.constant 0.000000e+00 : f32
    %13 = vector.broadcast %cst_11 : f32 to vector<8x128xf32>
    %14 = arith.maximumf %12, %13 : vector<8x128xf32>
    %c0_12 = arith.constant 0 : index
    %c0_13 = arith.constant 0 : index
    %15 = vector.load %arg6[%c0_12, %c0_13] : memref<128x128xf32, #tpu.memory_space<vmem>>, vector<128x128xf32>
    %cst_14 = arith.constant dense<0.000000e+00> : vector<8x128xf32>
    %16 = tpu.matmul %14, %15, %cst_14 {dimension_numbers = #tpu.dot_dimension_numbers<[1], [0], [0], [1], [0, 0, 1, 1], [], []>} : vector<8x128xf32>, vector<128x128xf32>, vector<8x128xf32> -> vector<8x128xf32>
    %c0_15 = arith.constant 0 : index
    %c0_16 = arith.constant 0 : index
    %17 = vector.load %arg7[%c0_15, %c0_16] : memref<1x128xf32, #tpu.memory_space<vmem>>, vector<1x128xf32>
    %18 = vector.broadcast %17 : vector<1x128xf32> to vector<8x128xf32>
    %19 = arith.addf %16, %18 : vector<8x128xf32>
    %cst_17 = arith.constant 0.000000e+00 : f32
    %20 = vector.broadcast %cst_17 : f32 to vector<8x128xf32>
    %21 = arith.maximumf %19, %20 : vector<8x128xf32>
    %c0_18 = arith.constant 0 : index
    %c0_19 = arith.constant 0 : index
    %22 = vector.load %arg8[%c0_18, %c0_19] : memref<128x128xf32, #tpu.memory_space<vmem>>, vector<128x128xf32>
    %cst_20 = arith.constant dense<0.000000e+00> : vector<8x128xf32>
    %23 = tpu.matmul %21, %22, %cst_20 {dimension_numbers = #tpu.dot_dimension_numbers<[1], [0], [0], [1], [0, 0, 1, 1], [], []>} : vector<8x128xf32>, vector<128x128xf32>, vector<8x128xf32> -> vector<8x128xf32>
    %c0_21 = arith.constant 0 : index
    %c0_22 = arith.constant 0 : index
    %24 = vector.load %arg9[%c0_21, %c0_22] : memref<1x128xf32, #tpu.memory_space<vmem>>, vector<1x128xf32>
    %25 = vector.broadcast %24 : vector<1x128xf32> to vector<8x128xf32>
    %26 = arith.addf %23, %25 : vector<8x128xf32>
    %c0_23 = arith.constant 0 : index
    %c0_24 = arith.constant 0 : index
    %27 = vector.load %arg10[%c0_23, %c0_24] : memref<8x128xf32, #tpu.memory_space<vmem>>, vector<8x128xf32>
    tpu.vector_store %arg10[%c0_23, %c0_24], %26 {strides = array<i32>} : memref<8x128xf32, #tpu.memory_space<vmem>>, vector<8x128xf32>,
    return
  }
  func.func @transform_0(%arg0: i32) -> (i32, i32) {
    %c0_i32 = arith.constant 0 : i32
    %c0_i32_0 = arith.constant 0 : i32
    return %arg0, %c0_i32 : i32, i32
  }
  func.func @transform_1(%arg0: i32) -> (i32, i32) {
    %c0_i32 = arith.constant 0 : i32
    %c0_i32_0 = arith.constant 0 : i32
    %c0_i32_1 = arith.constant 0 : i32
    return %c0_i32, %c0_i32_0 : i32, i32
  }
  func.func @transform_2(%arg0: i32) -> (i32, i32) {
    %c0_i32 = arith.constant 0 : i32
    %c0_i32_0 = arith.constant 0 : i32
    %c0_i32_1 = arith.constant 0 : i32
    return %c0_i32, %c0_i32_0 : i32, i32
  }
  func.func @transform_3(%arg0: i32) -> (i32, i32) {
    %c0_i32 = arith.constant 0 : i32
    %c0_i32_0 = arith.constant 0 : i32
    %c0_i32_1 = arith.constant 0 : i32
    return %c0_i32, %c0_i32_0 : i32, i32
  }
  func.func @transform_4(%arg0: i32) -> (i32, i32) {
    %c0_i32 = arith.constant 0 : i32
    %c0_i32_0 = arith.constant 0 : i32
    %c0_i32_1 = arith.constant 0 : i32
    return %c0_i32, %c0_i32_0 : i32, i32
  }
  func.func @transform_5(%arg0: i32) -> (i32, i32) {
    %c0_i32 = arith.constant 0 : i32
    %c0_i32_0 = arith.constant 0 : i32
    %c0_i32_1 = arith.constant 0 : i32
    return %c0_i32, %c0_i32_0 : i32, i32
  }
  func.func @transform_6(%arg0: i32) -> (i32, i32) {
    %c0_i32 = arith.constant 0 : i32
    %c0_i32_0 = arith.constant 0 : i32
    %c0_i32_1 = arith.constant 0 : i32
    return %c0_i32, %c0_i32_0 : i32, i32
  }
  func.func @transform_7(%arg0: i32) -> (i32, i32) {
    %c0_i32 = arith.constant 0 : i32
    %c0_i32_0 = arith.constant 0 : i32
    %c0_i32_1 = arith.constant 0 : i32
    return %c0_i32, %c0_i32_0 : i32, i32
  }
  func.func @transform_8(%arg0: i32) -> (i32, i32) {
    %c0_i32 = arith.constant 0 : i32
    %c0_i32_0 = arith.constant 0 : i32
    %c0_i32_1 = arith.constant 0 : i32
    return %c0_i32, %c0_i32_0 : i32, i32
  }
  func.func @transform_9(%arg0: i32) -> (i32, i32) {
    %c0_i32 = arith.constant 0 : i32
    %c0_i32_0 = arith.constant 0 : i32
    return %arg0, %c0_i32 : i32, i32
  }
}

</mosaic_0001>

<llo_original>
// kernel: tpu_custom_call.1
$region0: #{tpu_custom_call.1}
  #allocation0 [shape = 'u32[]', space=smem, size = 0x4, offset = 0x4, fixed_abs, tag = 'smem constant byte address 0x4 - core index']
  #allocation1 [shape = 'u32[72,128]{1,0:T(1,128)}', space=vmem, size = 0x9000, scoped, tag = 'internal scratch']
  %s0 = inlined_call_operand.hbm [shape: f32[8,128], index: 0, kind: input, shape index: {}]
  %s1 = inlined_call_operand.hbm [shape: f32[128,128], index: 1, kind: input, shape index: {}]
  %s2 = inlined_call_operand.vmem [shape: f32[1,128], index: 2, kind: input, shape index: {}]
  %s3 = inlined_call_operand.hbm [shape: f32[128,128], index: 3, kind: input, shape index: {}]
  %s4 = inlined_call_operand.vmem [shape: f32[1,128], index: 4, kind: input, shape index: {}]
  %s5 = inlined_call_operand.hbm [shape: f32[128,128], index: 5, kind: input, shape index: {}]
  %s6 = inlined_call_operand.vmem [shape: f32[1,128], index: 6, kind: input, shape index: {}]
  %s7 = inlined_call_operand.hbm [shape: f32[128,128], index: 7, kind: input, shape index: {}]
  %s8 = inlined_call_operand.vmem [shape: f32[1,128], index: 8, kind: input, shape index: {}]
  %s9 = inlined_call_operand.hbm [shape: f32[8,128], index: 9, kind: output, shape index: {}]
  %s10 = sld [smem:[#allocation0]]
  $region66: #{tpu_custom_call.1} parent=0
    _
  %s12 = ssub.s32 1, %s10
  %s13 = scalar_select 0, %s12, %s10
  $region1: #{tpu_custom_call.1} parent=0
    #allocation2 [shape = 'u8[4096]{0}', space=vmem, size = 0x1000, scoped, tag = 'input window, operand 0, single buffered']
    #allocation3 [shape = 's32[1]{0}', space=sflag, size = 0x4, scoped, tag = 'scoped memory for tpu_custom_call.1']
    #allocation4 [shape = 's32[1]{0}', space=sflag, size = 0x4, scoped, tag = 'scoped memory for tpu_custom_call.1']
    #allocation5 [shape = 'u8[65536]{0}', space=vmem, size = 0x10000, scoped, tag = 'input window, operand 1, single buffered']
    #allocation6 [shape = 's32[1]{0}', space=sflag, size = 0x4, scoped, tag = 'scoped memory for tpu_custom_call.1']
    #allocation7 [shape = 'u8[65536]{0}', space=vmem, size = 0x10000, scoped, tag = 'input window, operand 3, single buffered']
    #allocation8 [shape = 'u8[65536]{0}', space=vmem, size = 0x10000, scoped, tag = 'input window, operand 5, single buffered']
    #allocation9 [shape = 's32[1]{0}', space=sflag, size = 0x4, scoped, tag = 'scoped memory for tpu_custom_call.1']
    #allocation10 [shape = 'u8[65536]{0}', space=vmem, size = 0x10000, scoped, tag = 'input window, operand 7, single buffered']
    #allocation11 [shape = 'u8[4096]{0}', space=vmem, size = 0x1000, scoped, tag = 'output window, operand 0, single buffered']
    %14 = vsyncpa [#allocation3], 0
    %15 = vsyncpa [#allocation6], 0
    %16 = vsyncpa [#allocation9], 0
    %17 = vsyncpa [#allocation4], 0
    // Predicated region
    $region2: #{tpu_custom_call.1} parent=1 // pred_check
      _
    $region3: #{tpu_custom_call.1} parent=1 // pred_check_branch
      %19 = sbr.rel (0) target = $region5
    $region4: #{tpu_custom_call.1} parent=1 // pred_region
      %21 = vsyncadd [#allocation3], 0
      %s23 = sshll.u32 %s0, 4
      %s24 = int_to_ptr.hbm [resolvable:$true] %s23
      %s25 = sshll.u32 [#allocation2], 4
      %s26 = int_to_ptr.vmem [resolvable:$true] %s25
      %28 = dma.hbm_to_vmem [thread:$0]  %s24, 128, %s26, [#allocation3]
    $region5: #{tpu_custom_call.1} parent=1 // pred_fallthru
      _
    // Predicated region
    $region6: #{tpu_custom_call.1} parent=1 // pred_check
      _
    $region7: #{tpu_custom_call.1} parent=1 // pred_check_branch
      %30 = sbr.rel (0) target = $region9
    $region8: #{tpu_custom_call.1} parent=1 // pred_region
      %32 = vsyncadd [#allocation6], 0
      %s33 = sshll.u32 %s1, 4
      %s34 = int_to_ptr.hbm [resolvable:$true] %s33
      %s35 = sshll.u32 [#allocation5], 4
      %s36 = int_to_ptr.vmem [resolvable:$true] %s35
      %41 = dma.hbm_to_vmem [thread:$0]  %s34, 2048, %s36, [#allocation6], 128, 128, 8
    $region9: #{tpu_custom_call.1} parent=1 // pred_fallthru
      _
    // Predicated region
    $region10: #{tpu_custom_call.1} parent=1 // pred_check
      _
    $region11: #{tpu_custom_call.1} parent=1 // pred_check_branch
      %43 = sbr.rel (0) target = $region13
    $region12: #{tpu_custom_call.1} parent=1 // pred_region
      _
    $region13: #{tpu_custom_call.1} parent=1 // pred_fallthru
      _
    // Predicated region
    $region14: #{tpu_custom_call.1} parent=1 // pred_check
      _
    $region15: #{tpu_custom_call.1} parent=1 // pred_check_branch
      %45 = sbr.rel (0) target = $region17
    $region16: #{tpu_custom_call.1} parent=1 // pred_region
      %47 = vsyncadd [#allocation6], 0
      %s48 = sshll.u32 %s3, 4
      %s49 = int_to_ptr.hbm [resolvable:$true] %s48
      %s50 = sshll.u32 [#allocation7], 4
      %s51 = int_to_ptr.vmem [resolvable:$true] %s50
      %56 = dma.hbm_to_vmem [thread:$0]  %s49, 2048, %s51, [#allocation6], 128, 128, 8
    $region17: #{tpu_custom_call.1} parent=1 // pred_fallthru
      _
    // Predicated region
    $region18: #{tpu_custom_call.1} parent=1 // pred_check
      _
    $region19: #{tpu_custom_call.1} parent=1 // pred_check_branch
      %58 = sbr.rel (0) target = $region21
    $region20: #{tpu_custom_call.1} parent=1 // pred_region
      _
    $region21: #{tpu_custom_call.1} parent=1 // pred_fallthru
      _
    // Predicated region
    $region22: #{tpu_custom_call.1} parent=1 // pred_check
      _
    $region23: #{tpu_custom_call.1} parent=1 // pred_check_branch
      %60 = sbr.rel (0) target = $region25
    $region24: #{tpu_custom_call.1} parent=1 // pred_region
      %62 = vsyncadd [#allocation9], 0
      %s63 = sshll.u32 %s5, 4
      %s64 = int_to_ptr.hbm [resolvable:$true] %s63
      %s65 = sshll.u32 [#allocation8], 4
      %s66 = int_to_ptr.vmem [resolvable:$true] %s65
      %71 = dma.hbm_to_vmem [thread:$0]  %s64, 2048, %s66, [#allocation9], 128, 128, 8
    $region25: #{tpu_custom_call.1} parent=1 // pred_fallthru
      _
    // Predicated region
    $region26: #{tpu_custom_call.1} parent=1 // pred_check
      _
    $region27: #{tpu_custom_call.1} parent=1 // pred_check_branch
      %73 = sbr.rel (0) target = $region29
    $region28: #{tpu_custom_call.1} parent=1 // pred_region
      _
    $region29: #{tpu_custom_call.1} parent=1 // pred_fallthru
      _
    // Predicated region
    $region30: #{tpu_custom_call.1} parent=1 // pred_check
      _
    $region31: #{tpu_custom_call.1} parent=1 // pred_check_branch
      %75 = sbr.rel (0) target = $region33
    $region32: #{tpu_custom_call.1} parent=1 // pred_region
      %77 = vsyncadd [#allocation9], 0
      %s78 = sshll.u32 %s7, 4
      %s79 = int_to_ptr.hbm [resolvable:$true] %s78
      %s80 = sshll.u32 [#allocation10], 4
      %s81 = int_to_ptr.vmem [resolvable:$true] %s80
      %86 = dma.hbm_to_vmem [thread:$0]  %s79, 2048, %s81, [#allocation9], 128, 128, 8
    $region33: #{tpu_custom_call.1} parent=1 // pred_fallthru
      _
    // Predicated region
    $region34: #{tpu_custom_call.1} parent=1 // pred_check
      _
    $region35: #{tpu_custom_call.1} parent=1 // pred_check_branch
      %88 = sbr.rel (0) target = $region37
    $region36: #{tpu_custom_call.1} parent=1 // pred_region
      _
    $region37: #{tpu_custom_call.1} parent=1 // pred_fallthru
      _
    // Predicated region
    $region38: #{tpu_custom_call.1} parent=1 // pred_check
      _
    $region39: #{tpu_custom_call.1} parent=1 // pred_check_branch
      %90 = sbr.rel (0) target = $region41
    $region40: #{tpu_custom_call.1} parent=1 // pred_region
      %92 = dma.done [#allocation3], 128
    $region41: #{tpu_custom_call.1} parent=1 // pred_fallthru
      _
    // Predicated region
    $region42: #{tpu_custom_call.1} parent=1 // pred_check
      _
    $region43: #{tpu_custom_call.1} parent=1 // pred_check_branch
      %94 = sbr.rel (0) target = $region45
    $region44: #{tpu_custom_call.1} parent=1 // pred_region
      %96 = dma.done [#allocation6], 2048
    $region45: #{tpu_custom_call.1} parent=1 // pred_fallthru
      _
    // Predicated region
    $region46: #{tpu_custom_call.1} parent=1 // pred_check
      _
    $region47: #{tpu_custom_call.1} parent=1 // pred_check_branch
      %98 = sbr.rel (0) target = $region49
    $region48: #{tpu_custom_call.1} parent=1 // pred_region
      %100 = dma.done [#allocation6], 2048
    $region49: #{tpu_custom_call.1} parent=1 // pred_fallthru
      _
    // Predicated region
    $region50: #{tpu_custom_call.1} parent=1 // pred_check
      _
    $region51: #{tpu_custom_call.1} parent=1 // pred_check_branch
      %102 = sbr.rel (0) target = $region53
    $region52: #{tpu_custom_call.1} parent=1 // pred_region
      %104 = dma.done [#allocation9], 2048
    $region53: #{tpu_custom_call.1} parent=1 // pred_fallthru
      _
    // Predicated region
    $region54: #{tpu_custom_call.1} parent=1 // pred_check
      _
    $region55: #{tpu_custom_call.1} parent=1 // pred_check_branch
      %106 = sbr.rel (0) target = $region57
    $region56: #{tpu_custom_call.1} parent=1 // pred_region
      %108 = dma.done [#allocation9], 2048
    $region57: #{tpu_custom_call.1} parent=1 // pred_fallthru
      _
    %v109 = vld [vmem:[#allocation2] sm:$0xff]
    %v110 = vld [vmem:[#allocation5] sm:$0xff]
    %v111 = vld [vmem:[#allocation5 + $0x8] sm:$0xff]
    %v112 = vld [vmem:[#allocation5 + $0x10] sm:$0xff]
    %v113 = vld [vmem:[#allocation5 + $0x18] sm:$0xff]
    %v114 = vld [vmem:[#allocation5 + $0x20] sm:$0xff]
    %v115 = vld [vmem:[#allocation5 + $0x28] sm:$0xff]
    %v116 = vld [vmem:[#allocation5 + $0x30] sm:$0xff]
    %v117 = vld [vmem:[#allocation5 + $0x38] sm:$0xff]
    %v118 = vld [vmem:[#allocation5 + $0x40] sm:$0xff]
    %v119 = vld [vmem:[#allocation5 + $0x48] sm:$0xff]
    %v120 = vld [vmem:[#allocation5 + $0x50] sm:$0xff]
    %v121 = vld [vmem:[#allocation5 + $0x58] sm:$0xff]
    %v122 = vld [vmem:[#allocation5 + $0x60] sm:$0xff]
    %v123 = vld [vmem:[#allocation5 + $0x68] sm:$0xff]
    %v124 = vld [vmem:[#allocation5 + $0x70] sm:$0xff]
    %v125 = vld [vmem:[#allocation5 + $0x78] sm:$0xff]
    %v126 = vld [vmem:[%s2] sm:$0x1]
    %v128 = vperm.slane %v126, 0
    %130 = vmatpush.msra.mxu0 %v125
    %131 = vmatpush.msra.mxu0 %v124
    %132 = vmatpush.msra.mxu0 %v123
    %133 = vmatpush.msra.mxu0 %v122
    %134 = vmatpush.msra.mxu0 %v121
    %135 = vmatpush.msra.mxu0 %v120
    %136 = vmatpush.msra.mxu0 %v119
    %137 = vmatpush.msra.mxu0 %v118
    %138 = vmatpush.msra.mxu0 %v117
    %139 = vmatpush.msra.mxu0 %v116
    %140 = vmatpush.msra.mxu0 %v115
    %141 = vmatpush.msra.mxu0 %v114
    %142 = vmatpush.msra.mxu0 %v113
    %143 = vmatpush.msra.mxu0 %v112
    %144 = vmatpush.msra.mxu0 %v111
    %145 = vmatpush.msra.mxu0 %v110
    %146 = vmatmul.f32.gmra.mxu0 %v109
    %v147 = vpop.f32.mrf.mxu0
    %v148 = vadd.f32 %v128, %v147
    %149 = vdwg.mxu0
    %v150 = vmax.f32 %v148, 0.0
    %v151 = vld [vmem:[#allocation7] sm:$0xff]
    %v152 = vld [vmem:[#allocation7 + $0x8] sm:$0xff]
    %v153 = vld [vmem:[#allocation7 + $0x10] sm:$0xff]
    %v154 = vld [vmem:[#allocation7 + $0x18] sm:$0xff]
    %v155 = vld [vmem:[#allocation7 + $0x20] sm:$0xff]
    %v156 = vld [vmem:[#allocation7 + $0x28] sm:$0xff]
    %v157 = vld [vmem:[#allocation7 + $0x30] sm:$0xff]
    %v158 = vld [vmem:[#allocation7 + $0x38] sm:$0xff]
    %v159 = vld [vmem:[#allocation7 + $0x40] sm:$0xff]
    %v160 = vld [vmem:[#allocation7 + $0x48] sm:$0xff]
    %v161 = vld [vmem:[#allocation7 + $0x50] sm:$0xff]
    %v162 = vld [vmem:[#allocation7 + $0x58] sm:$0xff]
    %v163 = vld [vmem:[#allocation7 + $0x60] sm:$0xff]
    %v164 = vld [vmem:[#allocation7 + $0x68] sm:$0xff]
    %v165 = vld [vmem:[#allocation7 + $0x70] sm:$0xff]
    %v166 = vld [vmem:[#allocation7 + $0x78] sm:$0xff]
    %v167 = vld [vmem:[%s4] sm:$0x1]
    %v169 = vperm.slane %v167, 0
    %171 = vmatpush.msra.mxu0 %v166
    %172 = vmatpush.msra.mxu0 %v165
    %173 = vmatpush.msra.mxu0 %v164
    %174 = vmatpush.msra.mxu0 %v163
    %175 = vmatpush.msra.mxu0 %v162
    %176 = vmatpush.msra.mxu0 %v161
    %177 = vmatpush.msra.mxu0 %v160
    %178 = vmatpush.msra.mxu0 %v159
    %179 = vmatpush.msra.mxu0 %v158
    %180 = vmatpush.msra.mxu0 %v157
    %181 = vmatpush.msra.mxu0 %v156
    %182 = vmatpush.msra.mxu0 %v155
    %183 = vmatpush.msra.mxu0 %v154
    %184 = vmatpush.msra.mxu0 %v153
    %185 = vmatpush.msra.mxu0 %v152
    %186 = vmatpush.msra.mxu0 %v151
    %187 = vmatmul.f32.gmra.mxu0 %v150
    %v188 = vpop.f32.mrf.mxu0
    %v189 = vadd.f32 %v169, %v188
    %190 = vdwg.mxu0
    %v191 = vmax.f32 %v189, 0.0
    %v192 = vld [vmem:[#allocation8] sm:$0xff]
    %v193 = vld [vmem:[#allocation8 + $0x8] sm:$0xff]
    %v194 = vld [vmem:[#allocation8 + $0x10] sm:$0xff]
    %v195 = vld [vmem:[#allocation8 + $0x18] sm:$0xff]
    %v196 = vld [vmem:[#allocation8 + $0x20] sm:$0xff]
    %v197 = vld [vmem:[#allocation8 + $0x28] sm:$0xff]
    %v198 = vld [vmem:[#allocation8 + $0x30] sm:$0xff]
    %v199 = vld [vmem:[#allocation8 + $0x38] sm:$0xff]
    %v200 = vld [vmem:[#allocation8 + $0x40] sm:$0xff]
    %v201 = vld [vmem:[#allocation8 + $0x48] sm:$0xff]
    %v202 = vld [vmem:[#allocation8 + $0x50] sm:$0xff]
    %v203 = vld [vmem:[#allocation8 + $0x58] sm:$0xff]
    %v204 = vld [vmem:[#allocation8 + $0x60] sm:$0xff]
    %v205 = vld [vmem:[#allocation8 + $0x68] sm:$0xff]
    %v206 = vld [vmem:[#allocation8 + $0x70] sm:$0xff]
    %v207 = vld [vmem:[#allocation8 + $0x78] sm:$0xff]
    %v208 = vld [vmem:[%s6] sm:$0x1]
    %v210 = vperm.slane %v208, 0
    %212 = vmatpush.msra.mxu0 %v207
    %213 = vmatpush.msra.mxu0 %v206
    %214 = vmatpush.msra.mxu0 %v205
    %215 = vmatpush.msra.mxu0 %v204
    %216 = vmatpush.msra.mxu0 %v203
    %217 = vmatpush.msra.mxu0 %v202
    %218 = vmatpush.msra.mxu0 %v201
    %219 = vmatpush.msra.mxu0 %v200
    %220 = vmatpush.msra.mxu0 %v199
    %221 = vmatpush.msra.mxu0 %v198
    %222 = vmatpush.msra.mxu0 %v197
    %223 = vmatpush.msra.mxu0 %v196
    %224 = vmatpush.msra.mxu0 %v195
    %225 = vmatpush.msra.mxu0 %v194
    %226 = vmatpush.msra.mxu0 %v193
    %227 = vmatpush.msra.mxu0 %v192
    %228 = vmatmul.f32.gmra.mxu0 %v191
    %v229 = vpop.f32.mrf.mxu0
    %v230 = vadd.f32 %v210, %v229
    %231 = vdwg.mxu0
    %v232 = vmax.f32 %v230, 0.0
    %v233 = vld [vmem:[#allocation10] sm:$0xff]
    %v234 = vld [vmem:[#allocation10 + $0x8] sm:$0xff]
    %v235 = vld [vmem:[#allocation10 + $0x10] sm:$0xff]
    %v236 = vld [vmem:[#allocation10 + $0x18] sm:$0xff]
    %v237 = vld [vmem:[#allocation10 + $0x20] sm:$0xff]
    %v238 = vld [vmem:[#allocation10 + $0x28] sm:$0xff]
    %v239 = vld [vmem:[#allocation10 + $0x30] sm:$0xff]
    %v240 = vld [vmem:[#allocation10 + $0x38] sm:$0xff]
    %v241 = vld [vmem:[#allocation10 + $0x40] sm:$0xff]
    %v242 = vld [vmem:[#allocation10 + $0x48] sm:$0xff]
    %v243 = vld [vmem:[#allocation10 + $0x50] sm:$0xff]
    %v244 = vld [vmem:[#allocation10 + $0x58] sm:$0xff]
    %v245 = vld [vmem:[#allocation10 + $0x60] sm:$0xff]
    %v246 = vld [vmem:[#allocation10 + $0x68] sm:$0xff]
    %v247 = vld [vmem:[#allocation10 + $0x70] sm:$0xff]
    %v248 = vld [vmem:[#allocation10 + $0x78] sm:$0xff]
    %v249 = vld [vmem:[%s8] sm:$0x1]
    %v251 = vperm.slane %v249, 0
    %253 = vmatpush.msra.mxu0 %v248
    %254 = vmatpush.msra.mxu0 %v247
    %255 = vmatpush.msra.mxu0 %v246
    %256 = vmatpush.msra.mxu0 %v245
    %257 = vmatpush.msra.mxu0 %v244
    %258 = vmatpush.msra.mxu0 %v243
    %259 = vmatpush.msra.mxu0 %v242
    %260 = vmatpush.msra.mxu0 %v241
    %261 = vmatpush.msra.mxu0 %v240
    %262 = vmatpush.msra.mxu0 %v239
    %263 = vmatpush.msra.mxu0 %v238
    %264 = vmatpush.msra.mxu0 %v237
    %265 = vmatpush.msra.mxu0 %v236
    %266 = vmatpush.msra.mxu0 %v235
    %267 = vmatpush.msra.mxu0 %v234
    %268 = vmatpush.msra.mxu0 %v233
    %269 = vmatmul.f32.gmra.mxu0 %v232
    %v270 = vpop.f32.mrf.mxu0
    %v271 = vadd.f32 %v251, %v270
    %272 = vdwg.mxu0
    %273 = vst [vmem:[#allocation11] sm:$0xff] %v271
    // Predicated region
    $region58: #{tpu_custom_call.1} parent=1 // pred_check
      _
    $region59: #{tpu_custom_call.1} parent=1 // pred_check_branch
      %275 = sbr.rel (0) target = $region61
    $region60: #{tpu_custom_call.1} parent=1 // pred_region
      %277 = vsyncadd [#allocation4], 0
      %s279 = sshll.u32 [#allocation11], 4
      %s280 = int_to_ptr.vmem [resolvable:$true] %s279
      %s281 = sshll.u32 %s9, 4
      %s282 = int_to_ptr.hbm [resolvable:$true] %s281
      %284 = dma.vmem_to_hbm [thread:$0]  %s280, 128, %s282, [#allocation4]
    $region61: #{tpu_custom_call.1} parent=1 // pred_fallthru
      _
    // Predicated region
    $region62: #{tpu_custom_call.1} parent=1 // pred_check
      _
    $region63: #{tpu_custom_call.1} parent=1 // pred_check_branch
      %286 = sbr.rel (0) target = $region65
    $region64: #{tpu_custom_call.1} parent=1 // pred_region
      %288 = dma.done [#allocation4], 128
    $region65: #{tpu_custom_call.1} parent=1 // pred_fallthru
      _
    %289 = vsyncpa [#allocation3], 1
    %290 = vsyncpa [#allocation6], 1
    %291 = vsyncpa [#allocation9], 1
    %292 = vsyncpa [#allocation4], 1

</llo_original>
